<compile_context>
chip_gen: v5e
topology: v5e:2x2
jax: 0.10.0
libtpu: 0.0.40
codegen_flags: <defaults>
</compile_context>

<pallas_src>
import math

import jax
import jax.numpy as jnp
from jax.experimental import pallas as pl
from jax.experimental.pallas import tpu as pltpu


def _round_up(a: int, m: int) -> int:
    return (a + m - 1) // m * m


def _cdiv(a: int, b: int) -> int:
    return (a + b - 1) // b


def _row_pack_factor(width_in: int, width_out: int, max_pack: int = 16) -> int:
    """Smallest r such that r*width_in and r*width_out are both multiples of 128 lanes."""
    r_in = 128 // math.gcd(width_in, 128)
    r_out = 128 // math.gcd(width_out, 128)
    r = r_in * r_out // math.gcd(r_in, r_out)
    return r if r <= max_pack else 1


def _vmem_caps():
    """Return (tile budget bytes, physical VMEM cap bytes) for the current TPU generation."""
    cap = None
    try:
        info = pltpu.get_tpu_info()
        cap = getattr(info, "vmem_capacity_bytes", None)
    except Exception:
        cap = None
    if not cap:
        cap = 64 << 20                      # conservative fallback: v7x per-TC VMEM
    if cap <= (64 << 20):                   # v7x-class: 64 MiB physical
        return 44 << 20, cap
    return 96 << 20, cap                    # v5e / v6e: 128 MiB physical


def make_ffm_kernel(num_fields: int, emb: int, pack: int, compute_dtype):
    """FFM kernel body; small static loops fully unrolled.

    Refs:
      x_ref:     (TB, pack*F*E)  lane-dense packed input tile
      inter_ref: (1,  P*E)       precomputed pairwise weight products (VMEM-resident)
      o_ref:     (TB, pack*P*E)  lane-dense packed output tile
    """
    F, E = num_fields, emb
    pairs = [(i, j) for i in range(F) for j in range(i + 1, F)]
    P = len(pairs)

    def kernel(x_ref, inter_ref, o_ref):
        # Load each pair-weight slice once per tile (reused across all packed sub-rows).
        w = [inter_ref[:, p * E:(p + 1) * E].astype(compute_dtype) for p in range(P)]
        for s in range(pack):                       # unrolled over packed sub-rows
            xo, oo = s * F * E, s * P * E
            for p, (i, j) in enumerate(pairs):
                xi = x_ref[:, xo + i * E: xo + (i + 1) * E].astype(compute_dtype)
                xj = x_ref[:, xo + j * E: xo + (j + 1) * E].astype(compute_dtype)
                # Per-pair direct write: no (TB, P*E) f32 concatenate intermediate.
                o_ref[:, oo + p * E: oo + (p + 1) * E] = (xi * xj * w[p]).astype(o_ref.dtype)

    return kernel


def ffm_forward(x: jax.Array, feat_embedding: jax.Array, *,
                tb: int | None = None, target_step_bytes: int = 4 << 20) -> jax.Array:
    """Pallas FFM forward. x: (B, F, E), feat_embedding: (F, F, E) -> (B, P*E)."""
    B, F, E = x.shape
    assert F >= 2 and feat_embedding.shape == (F, F, E)
    P = F * (F - 1) // 2
    itemsize = jnp.dtype(x.dtype).itemsize

    # Pairwise weight products, upper-triangle order matching the PyTorch (i, j>i) loop.
    iu, ju = jnp.triu_indices(F, k=1)
    inter = (feat_embedding[iu, ju, :] * feat_embedding[ju, iu, :]).reshape(1, P * E)

    # --- Row packing so both BlockSpec lane widths are multiples of 128 (lane-dense). ---
    r = _row_pack_factor(F * E, P * E)
    w_in, w_out = r * F * E, r * P * E
    row_bytes = (w_in + w_out) * itemsize           # HBM traffic per packed row

    # --- Tile sizing in packed rows: amortize per-step overhead, respect VMEM budget. ---
    sub = 8 if itemsize >= 4 else (16 if itemsize == 2 else 32)
    budget, vmem_cap = _vmem_caps()
    rows_needed = _cdiv(B, r)
    if tb is None:
        tb_target = max(sub, target_step_bytes // row_bytes)      # ~4 MiB HBM per step
        tb_vmem = max(sub, budget // (2 * row_bytes))             # in+out double-buffered
        TB = max(sub, (min(tb_target, tb_vmem) // sub) * sub)
        # Keep >= 2 grid steps when there is enough work (megacore sharding on v7x).
        if rows_needed >= 2 * sub:
            TB = min(TB, _round_up(_cdiv(rows_needed, 2), sub))
    else:
        TB = _round_up(tb, sub)
    TB = min(TB, _round_up(rows_needed, sub))

    rows_p = _round_up(rows_needed, TB)             # packed rows after padding
    Bp = rows_p * r

    x2 = x.reshape(B, F * E)
    if Bp != B:
        x2 = jnp.pad(x2, ((0, Bp - B), (0, 0)))     # zero rows -> zero outputs, sliced off
    x2 = x2.reshape(rows_p, w_in)                   # contiguous (free) row packing

    compute_dtype = jnp.float32 if itemsize >= 4 else x.dtype
    kernel = make_ffm_kernel(F, E, r, compute_dtype)

    tile_bytes = 2 * TB * row_bytes + 2 * P * E * itemsize        # double-buffered tiles
    vmem_limit = int(min(vmem_cap, max(32 << 20, tile_bytes + (8 << 20))))

    out = pl.pallas_call(
        kernel,
        out_shape=jax.ShapeDtypeStruct((rows_p, w_out), x.dtype),
        grid=(rows_p // TB,),
        in_specs=[
            pl.BlockSpec((TB, w_in), lambda b: (b, 0)),    # streamed lane-dense batch tiles
            pl.BlockSpec((1, P * E), lambda b: (0, 0)),    # constant -> VMEM-resident weights
        ],
        out_specs=pl.BlockSpec((TB, w_out), lambda b: (b, 0)),
        compiler_params=pltpu.CompilerParams(
            dimension_semantics=("parallel",),             # independent batch tiles
            vmem_limit_bytes=vmem_limit),
        cost_estimate=pl.CostEstimate(
            flops=2 * Bp * P * E,
            transcendentals=0,
            bytes_accessed=Bp * (F * E + P * E) * itemsize + P * E * itemsize),
    )(x2, inter)

    return out.reshape(Bp, P * E)[:B]


def ffm_reference(x: jax.Array, feat_embedding: jax.Array) -> jax.Array:
    """Pure-JAX reference mirroring the PyTorch loop semantics."""
    B, F, E = x.shape
    parts = []
    for i in range(F):
        for j in range(i + 1, F):
            inter = feat_embedding[i, j, :] * feat_embedding[j, i, :]   # (E,)
            xij = x[:, i, :] * x[:, j, :]                               # (B, E)
            parts.append(xij * inter[None, :])
    return jnp.concatenate(parts, axis=-1)


if __name__ == "__main__":
    # Small deterministic shapes consistent with the module's forward:
    # batch=2, num_fields=4, embedding dim=16.
    B, F, E = 2, 4, 16
    key = jax.random.PRNGKey(0)
    kx, kw = jax.random.split(key)
    x = jax.random.normal(kx, (B, F, E), dtype=jnp.float32)
    feat_embedding = jax.random.normal(kw, (F, F, E), dtype=jnp.float32)

    out = jax.block_until_ready(ffm_forward(x, feat_embedding))
    ref = ffm_reference(x, feat_embedding)
    assert out.shape == (B, (F * (F - 1) // 2) * E), out.shape
    assert jnp.allclose(out, ref, atol=1e-5, rtol=1e-5), "mismatch vs reference"

    # Also exercise padding + multi-tile (grid > 1) path with a batch that is not a
    # multiple of the packed tile size.
    B2 = 37
    x_big = jax.random.normal(kx, (B2, F, E), dtype=jnp.float32)
    out_big = jax.block_until_ready(ffm_forward(x_big, feat_embedding, tb=8))
    ref_big = ffm_reference(x_big, feat_embedding)
    assert out_big.shape == ref_big.shape
    assert jnp.allclose(out_big, ref_big, atol=1e-5, rtol=1e-5), "mismatch (padded batch)"

    print("KERNEL_OK")
</pallas_src>

<mosaic_0001>
module attributes {stable_mosaic.version = 11 : i64} {
  func.func @kernel(%arg0: i32, %arg1: memref<8x256xf32, #tpu.memory_space<vmem>>, %arg2: memref<1x96xf32, #tpu.memory_space<vmem>>, %arg3: memref<8x384xf32, #tpu.memory_space<vmem>>) attributes {dimension_semantics = [#tpu.dimension_semantics<parallel>], iteration_bounds = array<i64: 1>, scalar_prefetch = 0 : i64, scratch_operands = 0 : i64, tpu.core_type = #tpu.core_type<tc>, window_params = [{transform_indices = @transform_0, window_bounds = array<i64: 8, 256>}, {pipeline_mode = #tpu.pipeline_mode<synchronous>, transform_indices = @transform_1, window_bounds = array<i64: 1, 96>}, {transform_indices = @transform_2, window_bounds = array<i64: 8, 384>}]} {
    %c0 = arith.constant 0 : index
    %c0_0 = arith.constant 0 : index
    %0 = vector.load %arg2[%c0, %c0_0] : memref<1x96xf32, #tpu.memory_space<vmem>>, vector<1x16xf32>
    %c0_1 = arith.constant 0 : index
    %c16 = arith.constant 16 : index
    %1 = vector.load %arg2[%c0_1, %c16] : memref<1x96xf32, #tpu.memory_space<vmem>>, vector<1x16xf32>
    %c0_2 = arith.constant 0 : index
    %c32 = arith.constant 32 : index
    %2 = vector.load %arg2[%c0_2, %c32] : memref<1x96xf32, #tpu.memory_space<vmem>>, vector<1x16xf32>
    %c0_3 = arith.constant 0 : index
    %c48 = arith.constant 48 : index
    %3 = vector.load %arg2[%c0_3, %c48] : memref<1x96xf32, #tpu.memory_space<vmem>>, vector<1x16xf32>
    %c0_4 = arith.constant 0 : index
    %c64 = arith.constant 64 : index
    %4 = vector.load %arg2[%c0_4, %c64] : memref<1x96xf32, #tpu.memory_space<vmem>>, vector<1x16xf32>
    %c0_5 = arith.constant 0 : index
    %c80 = arith.constant 80 : index
    %5 = vector.load %arg2[%c0_5, %c80] : memref<1x96xf32, #tpu.memory_space<vmem>>, vector<1x16xf32>
    %c0_6 = arith.constant 0 : index
    %c0_7 = arith.constant 0 : index
    %6 = vector.load %arg1[%c0_6, %c0_7] : memref<8x256xf32, #tpu.memory_space<vmem>>, vector<8x16xf32>
    %c0_8 = arith.constant 0 : index
    %c16_9 = arith.constant 16 : index
    %7 = vector.load %arg1[%c0_8, %c16_9] : memref<8x256xf32, #tpu.memory_space<vmem>>, vector<8x16xf32>
    %8 = arith.mulf %6, %7 : vector<8x16xf32>
    %9 = vector.broadcast %0 : vector<1x16xf32> to vector<8x16xf32>
    %10 = arith.mulf %8, %9 : vector<8x16xf32>
    %c0_10 = arith.constant 0 : index
    %c0_11 = arith.constant 0 : index
    %11 = vector.load %arg3[%c0_10, %c0_11] : memref<8x384xf32, #tpu.memory_space<vmem>>, vector<8x16xf32>
    tpu.vector_store %arg3[%c0_10, %c0_11], %10 {strides = array<i32>} : memref<8x384xf32, #tpu.memory_space<vmem>>, vector<8x16xf32>,
    %c0_12 = arith.constant 0 : index
    %c0_13 = arith.constant 0 : index
    %12 = vector.load %arg1[%c0_12, %c0_13] : memref<8x256xf32, #tpu.memory_space<vmem>>, vector<8x16xf32>
    %c0_14 = arith.constant 0 : index
    %c32_15 = arith.constant 32 : index
    %13 = vector.load %arg1[%c0_14, %c32_15] : memref<8x256xf32, #tpu.memory_space<vmem>>, vector<8x16xf32>
    %14 = arith.mulf %12, %13 : vector<8x16xf32>
    %15 = vector.broadcast %1 : vector<1x16xf32> to vector<8x16xf32>
    %16 = arith.mulf %14, %15 : vector<8x16xf32>
    %c0_16 = arith.constant 0 : index
    %c16_17 = arith.constant 16 : index
    %17 = vector.load %arg3[%c0_16, %c16_17] : memref<8x384xf32, #tpu.memory_space<vmem>>, vector<8x16xf32>
    tpu.vector_store %arg3[%c0_16, %c16_17], %16 {strides = array<i32>} : memref<8x384xf32, #tpu.memory_space<vmem>>, vector<8x16xf32>,
    %c0_18 = arith.constant 0 : index
    %c0_19 = arith.constant 0 : index
    %18 = vector.load %arg1[%c0_18, %c0_19] : memref<8x256xf32, #tpu.memory_space<vmem>>, vector<8x16xf32>
    %c0_20 = arith.constant 0 : index
    %c48_21 = arith.constant 48 : index
    %19 = vector.load %arg1[%c0_20, %c48_21] : memref<8x256xf32, #tpu.memory_space<vmem>>, vector<8x16xf32>
    %20 = arith.mulf %18, %19 : vector<8x16xf32>
    %21 = vector.broadcast %2 : vector<1x16xf32> to vector<8x16xf32>
    %22 = arith.mulf %20, %21 : vector<8x16xf32>
    %c0_22 = arith.constant 0 : index
    %c32_23 = arith.constant 32 : index
    %23 = vector.load %arg3[%c0_22, %c32_23] : memref<8x384xf32, #tpu.memory_space<vmem>>, vector<8x16xf32>
    tpu.vector_store %arg3[%c0_22, %c32_23], %22 {strides = array<i32>} : memref<8x384xf32, #tpu.memory_space<vmem>>, vector<8x16xf32>,
    %c0_24 = arith.constant 0 : index
    %c16_25 = arith.constant 16 : index
    %24 = vector.load %arg1[%c0_24, %c16_25] : memref<8x256xf32, #tpu.memory_space<vmem>>, vector<8x16xf32>
    %c0_26 = arith.constant 0 : index
    %c32_27 = arith.constant 32 : index
    %25 = vector.load %arg1[%c0_26, %c32_27] : memref<8x256xf32, #tpu.memory_space<vmem>>, vector<8x16xf32>
    %26 = arith.mulf %24, %25 : vector<8x16xf32>
    %27 = vector.broadcast %3 : vector<1x16xf32> to vector<8x16xf32>
    %28 = arith.mulf %26, %27 : vector<8x16xf32>
    %c0_28 = arith.constant 0 : index
    %c48_29 = arith.constant 48 : index
    %29 = vector.load %arg3[%c0_28, %c48_29] : memref<8x384xf32, #tpu.memory_space<vmem>>, vector<8x16xf32>
    tpu.vector_store %arg3[%c0_28, %c48_29], %28 {strides = array<i32>} : memref<8x384xf32, #tpu.memory_space<vmem>>, vector<8x16xf32>,
    %c0_30 = arith.constant 0 : index
    %c16_31 = arith.constant 16 : index
    %30 = vector.load %arg1[%c0_30, %c16_31] : memref<8x256xf32, #tpu.memory_space<vmem>>, vector<8x16xf32>
    %c0_32 = arith.constant 0 : index
    %c48_33 = arith.constant 48 : index
    %31 = vector.load %arg1[%c0_32, %c48_33] : memref<8x256xf32, #tpu.memory_space<vmem>>, vector<8x16xf32>
    %32 = arith.mulf %30, %31 : vector<8x16xf32>
    %33 = vector.broadcast %4 : vector<1x16xf32> to vector<8x16xf32>
    %34 = arith.mulf %32, %33 : vector<8x16xf32>
    %c0_34 = arith.constant 0 : index
    %c64_35 = arith.constant 64 : index
    %35 = vector.load %arg3[%c0_34, %c64_35] : memref<8x384xf32, #tpu.memory_space<vmem>>, vector<8x16xf32>
    tpu.vector_store %arg3[%c0_34, %c64_35], %34 {strides = array<i32>} : memref<8x384xf32, #tpu.memory_space<vmem>>, vector<8x16xf32>,
    %c0_36 = arith.constant 0 : index
    %c32_37 = arith.constant 32 : index
    %36 = vector.load %arg1[%c0_36, %c32_37] : memref<8x256xf32, #tpu.memory_space<vmem>>, vector<8x16xf32>
    %c0_38 = arith.constant 0 : index
    %c48_39 = arith.constant 48 : index
    %37 = vector.load %arg1[%c0_38, %c48_39] : memref<8x256xf32, #tpu.memory_space<vmem>>, vector<8x16xf32>
    %38 = arith.mulf %36, %37 : vector<8x16xf32>
    %39 = vector.broadcast %5 : vector<1x16xf32> to vector<8x16xf32>
    %40 = arith.mulf %38, %39 : vector<8x16xf32>
    %c0_40 = arith.constant 0 : index
    %c80_41 = arith.constant 80 : index
    %41 = vector.load %arg3[%c0_40, %c80_41] : memref<8x384xf32, #tpu.memory_space<vmem>>, vector<8x16xf32>
    tpu.vector_store %arg3[%c0_40, %c80_41], %40 {strides = array<i32>} : memref<8x384xf32, #tpu.memory_space<vmem>>, vector<8x16xf32>,
    %c0_42 = arith.constant 0 : index
    %c64_43 = arith.constant 64 : index
    %42 = vector.load %arg1[%c0_42, %c64_43] : memref<8x256xf32, #tpu.memory_space<vmem>>, vector<8x16xf32>
    %c0_44 = arith.constant 0 : index
    %c80_45 = arith.constant 80 : index
    %43 = vector.load %arg1[%c0_44, %c80_45] : memref<8x256xf32, #tpu.memory_space<vmem>>, vector<8x16xf32>
    %44 = arith.mulf %42, %43 : vector<8x16xf32>
    %45 = vector.broadcast %0 : vector<1x16xf32> to vector<8x16xf32>
    %46 = arith.mulf %44, %45 : vector<8x16xf32>
    %c0_46 = arith.constant 0 : index
    %c96 = arith.constant 96 : index
    %47 = vector.load %arg3[%c0_46, %c96] : memref<8x384xf32, #tpu.memory_space<vmem>>, vector<8x16xf32>
    tpu.vector_store %arg3[%c0_46, %c96], %46 {strides = array<i32>} : memref<8x384xf32, #tpu.memory_space<vmem>>, vector<8x16xf32>,
    %c0_47 = arith.constant 0 : index
    %c64_48 = arith.constant 64 : index
    %48 = vector.load %arg1[%c0_47, %c64_48] : memref<8x256xf32, #tpu.memory_space<vmem>>, vector<8x16xf32>
    %c0_49 = arith.constant 0 : index
    %c96_50 = arith.constant 96 : index
    %49 = vector.load %arg1[%c0_49, %c96_50] : memref<8x256xf32, #tpu.memory_space<vmem>>, vector<8x16xf32>
    %50 = arith.mulf %48, %49 : vector<8x16xf32>
    %51 = vector.broadcast %1 : vector<1x16xf32> to vector<8x16xf32>
    %52 = arith.mulf %50, %51 : vector<8x16xf32>
    %c0_51 = arith.constant 0 : index
    %c112 = arith.constant 112 : index
    %53 = vector.load %arg3[%c0_51, %c112] : memref<8x384xf32, #tpu.memory_space<vmem>>, vector<8x16xf32>
    tpu.vector_store %arg3[%c0_51, %c112], %52 {strides = array<i32>} : memref<8x384xf32, #tpu.memory_space<vmem>>, vector<8x16xf32>,
    %c0_52 = arith.constant 0 : index
    %c64_53 = arith.constant 64 : index
    %54 = vector.load %arg1[%c0_52, %c64_53] : memref<8x256xf32, #tpu.memory_space<vmem>>, vector<8x16xf32>
    %c0_54 = arith.constant 0 : index
    %c112_55 = arith.constant 112 : index
    %55 = vector.load %arg1[%c0_54, %c112_55] : memref<8x256xf32, #tpu.memory_space<vmem>>, vector<8x16xf32>
    %56 = arith.mulf %54, %55 : vector<8x16xf32>
    %57 = vector.broadcast %2 : vector<1x16xf32> to vector<8x16xf32>
    %58 = arith.mulf %56, %57 : vector<8x16xf32>
    %c0_56 = arith.constant 0 : index
    %c128 = arith.constant 128 : index
    %59 = vector.load %arg3[%c0_56, %c128] : memref<8x384xf32, #tpu.memory_space<vmem>>, vector<8x16xf32>
    tpu.vector_store %arg3[%c0_56, %c128], %58 {strides = array<i32>} : memref<8x384xf32, #tpu.memory_space<vmem>>, vector<8x16xf32>,
    %c0_57 = arith.constant 0 : index
    %c80_58 = arith.constant 80 : index
    %60 = vector.load %arg1[%c0_57, %c80_58] : memref<8x256xf32, #tpu.memory_space<vmem>>, vector<8x16xf32>
    %c0_59 = arith.constant 0 : index
    %c96_60 = arith.constant 96 : index
    %61 = vector.load %arg1[%c0_59, %c96_60] : memref<8x256xf32, #tpu.memory_space<vmem>>, vector<8x16xf32>
    %62 = arith.mulf %60, %61 : vector<8x16xf32>
    %63 = vector.broadcast %3 : vector<1x16xf32> to vector<8x16xf32>
    %64 = arith.mulf %62, %63 : vector<8x16xf32>
    %c0_61 = arith.constant 0 : index
    %c144 = arith.constant 144 : index
    %65 = vector.load %arg3[%c0_61, %c144] : memref<8x384xf32, #tpu.memory_space<vmem>>, vector<8x16xf32>
    tpu.vector_store %arg3[%c0_61, %c144], %64 {strides = array<i32>} : memref<8x384xf32, #tpu.memory_space<vmem>>, vector<8x16xf32>,
    %c0_62 = arith.constant 0 : index
    %c80_63 = arith.constant 80 : index
    %66 = vector.load %arg1[%c0_62, %c80_63] : memref<8x256xf32, #tpu.memory_space<vmem>>, vector<8x16xf32>
    %c0_64 = arith.constant 0 : index
    %c112_65 = arith.constant 112 : index
    %67 = vector.load %arg1[%c0_64, %c112_65] : memref<8x256xf32, #tpu.memory_space<vmem>>, vector<8x16xf32>
    %68 = arith.mulf %66, %67 : vector<8x16xf32>
    %69 = vector.broadcast %4 : vector<1x16xf32> to vector<8x16xf32>
    %70 = arith.mulf %68, %69 : vector<8x16xf32>
    %c0_66 = arith.constant 0 : index
    %c160 = arith.constant 160 : index
    %71 = vector.load %arg3[%c0_66, %c160] : memref<8x384xf32, #tpu.memory_space<vmem>>, vector<8x16xf32>
    tpu.vector_store %arg3[%c0_66, %c160], %70 {strides = array<i32>} : memref<8x384xf32, #tpu.memory_space<vmem>>, vector<8x16xf32>,
    %c0_67 = arith.constant 0 : index
    %c96_68 = arith.constant 96 : index
    %72 = vector.load %arg1[%c0_67, %c96_68] : memref<8x256xf32, #tpu.memory_space<vmem>>, vector<8x16xf32>
    %c0_69 = arith.constant 0 : index
    %c112_70 = arith.constant 112 : index
    %73 = vector.load %arg1[%c0_69, %c112_70] : memref<8x256xf32, #tpu.memory_space<vmem>>, vector<8x16xf32>
    %74 = arith.mulf %72, %73 : vector<8x16xf32>
    %75 = vector.broadcast %5 : vector<1x16xf32> to vector<8x16xf32>
    %76 = arith.mulf %74, %75 : vector<8x16xf32>
    %c0_71 = arith.constant 0 : index
    %c176 = arith.constant 176 : index
    %77 = vector.load %arg3[%c0_71, %c176] : memref<8x384xf32, #tpu.memory_space<vmem>>, vector<8x16xf32>
    tpu.vector_store %arg3[%c0_71, %c176], %76 {strides = array<i32>} : memref<8x384xf32, #tpu.memory_space<vmem>>, vector<8x16xf32>,
    %c0_72 = arith.constant 0 : index
    %c128_73 = arith.constant 128 : index
    %78 = vector.load %arg1[%c0_72, %c128_73] : memref<8x256xf32, #tpu.memory_space<vmem>>, vector<8x16xf32>
    %c0_74 = arith.constant 0 : index
    %c144_75 = arith.constant 144 : index
    %79 = vector.load %arg1[%c0_74, %c144_75] : memref<8x256xf32, #tpu.memory_space<vmem>>, vector<8x16xf32>
    %80 = arith.mulf %78, %79 : vector<8x16xf32>
    %81 = vector.broadcast %0 : vector<1x16xf32> to vector<8x16xf32>
    %82 = arith.mulf %80, %81 : vector<8x16xf32>
    %c0_76 = arith.constant 0 : index
    %c192 = arith.constant 192 : index
    %83 = vector.load %arg3[%c0_76, %c192] : memref<8x384xf32, #tpu.memory_space<vmem>>, vector<8x16xf32>
    tpu.vector_store %arg3[%c0_76, %c192], %82 {strides = array<i32>} : memref<8x384xf32, #tpu.memory_space<vmem>>, vector<8x16xf32>,
    %c0_77 = arith.constant 0 : index
    %c128_78 = arith.constant 128 : index
    %84 = vector.load %arg1[%c0_77, %c128_78] : memref<8x256xf32, #tpu.memory_space<vmem>>, vector<8x16xf32>
    %c0_79 = arith.constant 0 : index
    %c160_80 = arith.constant 160 : index
    %85 = vector.load %arg1[%c0_79, %c160_80] : memref<8x256xf32, #tpu.memory_space<vmem>>, vector<8x16xf32>
    %86 = arith.mulf %84, %85 : vector<8x16xf32>
    %87 = vector.broadcast %1 : vector<1x16xf32> to vector<8x16xf32>
    %88 = arith.mulf %86, %87 : vector<8x16xf32>
    %c0_81 = arith.constant 0 : index
    %c208 = arith.constant 208 : index
    %89 = vector.load %arg3[%c0_81, %c208] : memref<8x384xf32, #tpu.memory_space<vmem>>, vector<8x16xf32>
    tpu.vector_store %arg3[%c0_81, %c208], %88 {strides = array<i32>} : memref<8x384xf32, #tpu.memory_space<vmem>>, vector<8x16xf32>,
    %c0_82 = arith.constant 0 : index
    %c128_83 = arith.constant 128 : index
    %90 = vector.load %arg1[%c0_82, %c128_83] : memref<8x256xf32, #tpu.memory_space<vmem>>, vector<8x16xf32>
    %c0_84 = arith.constant 0 : index
    %c176_85 = arith.constant 176 : index
    %91 = vector.load %arg1[%c0_84, %c176_85] : memref<8x256xf32, #tpu.memory_space<vmem>>, vector<8x16xf32>
    %92 = arith.mulf %90, %91 : vector<8x16xf32>
    %93 = vector.broadcast %2 : vector<1x16xf32> to vector<8x16xf32>
    %94 = arith.mulf %92, %93 : vector<8x16xf32>
    %c0_86 = arith.constant 0 : index
    %c224 = arith.constant 224 : index
    %95 = vector.load %arg3[%c0_86, %c224] : memref<8x384xf32, #tpu.memory_space<vmem>>, vector<8x16xf32>
    tpu.vector_store %arg3[%c0_86, %c224], %94 {strides = array<i32>} : memref<8x384xf32, #tpu.memory_space<vmem>>, vector<8x16xf32>,
    %c0_87 = arith.constant 0 : index
    %c144_88 = arith.constant 144 : index
    %96 = vector.load %arg1[%c0_87, %c144_88] : memref<8x256xf32, #tpu.memory_space<vmem>>, vector<8x16xf32>
    %c0_89 = arith.constant 0 : index
    %c160_90 = arith.constant 160 : index
    %97 = vector.load %arg1[%c0_89, %c160_90] : memref<8x256xf32, #tpu.memory_space<vmem>>, vector<8x16xf32>
    %98 = arith.mulf %96, %97 : vector<8x16xf32>
    %99 = vector.broadcast %3 : vector<1x16xf32> to vector<8x16xf32>
    %100 = arith.mulf %98, %99 : vector<8x16xf32>
    %c0_91 = arith.constant 0 : index
    %c240 = arith.constant 240 : index
    %101 = vector.load %arg3[%c0_91, %c240] : memref<8x384xf32, #tpu.memory_space<vmem>>, vector<8x16xf32>
    tpu.vector_store %arg3[%c0_91, %c240], %100 {strides = array<i32>} : memref<8x384xf32, #tpu.memory_space<vmem>>, vector<8x16xf32>,
    %c0_92 = arith.constant 0 : index
    %c144_93 = arith.constant 144 : index
    %102 = vector.load %arg1[%c0_92, %c144_93] : memref<8x256xf32, #tpu.memory_space<vmem>>, vector<8x16xf32>
    %c0_94 = arith.constant 0 : index
    %c176_95 = arith.constant 176 : index
    %103 = vector.load %arg1[%c0_94, %c176_95] : memref<8x256xf32, #tpu.memory_space<vmem>>, vector<8x16xf32>
    %104 = arith.mulf %102, %103 : vector<8x16xf32>
    %105 = vector.broadcast %4 : vector<1x16xf32> to vector<8x16xf32>
    %106 = arith.mulf %104, %105 : vector<8x16xf32>
    %c0_96 = arith.constant 0 : index
    %c256 = arith.constant 256 : index
    %107 = vector.load %arg3[%c0_96, %c256] : memref<8x384xf32, #tpu.memory_space<vmem>>, vector<8x16xf32>
    tpu.vector_store %arg3[%c0_96, %c256], %106 {strides = array<i32>} : memref<8x384xf32, #tpu.memory_space<vmem>>, vector<8x16xf32>,
    %c0_97 = arith.constant 0 : index
    %c160_98 = arith.constant 160 : index
    %108 = vector.load %arg1[%c0_97, %c160_98] : memref<8x256xf32, #tpu.memory_space<vmem>>, vector<8x16xf32>
    %c0_99 = arith.constant 0 : index
    %c176_100 = arith.constant 176 : index
    %109 = vector.load %arg1[%c0_99, %c176_100] : memref<8x256xf32, #tpu.memory_space<vmem>>, vector<8x16xf32>
    %110 = arith.mulf %108, %109 : vector<8x16xf32>
    %111 = vector.broadcast %5 : vector<1x16xf32> to vector<8x16xf32>
    %112 = arith.mulf %110, %111 : vector<8x16xf32>
    %c0_101 = arith.constant 0 : index
    %c272 = arith.constant 272 : index
    %113 = vector.load %arg3[%c0_101, %c272] : memref<8x384xf32, #tpu.memory_space<vmem>>, vector<8x16xf32>
    tpu.vector_store %arg3[%c0_101, %c272], %112 {strides = array<i32>} : memref<8x384xf32, #tpu.memory_space<vmem>>, vector<8x16xf32>,
    %c0_102 = arith.constant 0 : index
    %c192_103 = arith.constant 192 : index
    %114 = vector.load %arg1[%c0_102, %c192_103] : memref<8x256xf32, #tpu.memory_space<vmem>>, vector<8x16xf32>
    %c0_104 = arith.constant 0 : index
    %c208_105 = arith.constant 208 : index
    %115 = vector.load %arg1[%c0_104, %c208_105] : memref<8x256xf32, #tpu.memory_space<vmem>>, vector<8x16xf32>
    %116 = arith.mulf %114, %115 : vector<8x16xf32>
    %117 = vector.broadcast %0 : vector<1x16xf32> to vector<8x16xf32>
    %118 = arith.mulf %116, %117 : vector<8x16xf32>
    %c0_106 = arith.constant 0 : index
    %c288 = arith.constant 288 : index
    %119 = vector.load %arg3[%c0_106, %c288] : memref<8x384xf32, #tpu.memory_space<vmem>>, vector<8x16xf32>
    tpu.vector_store %arg3[%c0_106, %c288], %118 {strides = array<i32>} : memref<8x384xf32, #tpu.memory_space<vmem>>, vector<8x16xf32>,
    %c0_107 = arith.constant 0 : index
    %c192_108 = arith.constant 192 : index
    %120 = vector.load %arg1[%c0_107, %c192_108] : memref<8x256xf32, #tpu.memory_space<vmem>>, vector<8x16xf32>
    %c0_109 = arith.constant 0 : index
    %c224_110 = arith.constant 224 : index
    %121 = vector.load %arg1[%c0_109, %c224_110] : memref<8x256xf32, #tpu.memory_space<vmem>>, vector<8x16xf32>
    %122 = arith.mulf %120, %121 : vector<8x16xf32>
    %123 = vector.broadcast %1 : vector<1x16xf32> to vector<8x16xf32>
    %124 = arith.mulf %122, %123 : vector<8x16xf32>
    %c0_111 = arith.constant 0 : index
    %c304 = arith.constant 304 : index
    %125 = vector.load %arg3[%c0_111, %c304] : memref<8x384xf32, #tpu.memory_space<vmem>>, vector<8x16xf32>
    tpu.vector_store %arg3[%c0_111, %c304], %124 {strides = array<i32>} : memref<8x384xf32, #tpu.memory_space<vmem>>, vector<8x16xf32>,
    %c0_112 = arith.constant 0 : index
    %c192_113 = arith.constant 192 : index
    %126 = vector.load %arg1[%c0_112, %c192_113] : memref<8x256xf32, #tpu.memory_space<vmem>>, vector<8x16xf32>
    %c0_114 = arith.constant 0 : index
    %c240_115 = arith.constant 240 : index
    %127 = vector.load %arg1[%c0_114, %c240_115] : memref<8x256xf32, #tpu.memory_space<vmem>>, vector<8x16xf32>
    %128 = arith.mulf %126, %127 : vector<8x16xf32>
    %129 = vector.broadcast %2 : vector<1x16xf32> to vector<8x16xf32>
    %130 = arith.mulf %128, %129 : vector<8x16xf32>
    %c0_116 = arith.constant 0 : index
    %c320 = arith.constant 320 : index
    %131 = vector.load %arg3[%c0_116, %c320] : memref<8x384xf32, #tpu.memory_space<vmem>>, vector<8x16xf32>
    tpu.vector_store %arg3[%c0_116, %c320], %130 {strides = array<i32>} : memref<8x384xf32, #tpu.memory_space<vmem>>, vector<8x16xf32>,
    %c0_117 = arith.constant 0 : index
    %c208_118 = arith.constant 208 : index
    %132 = vector.load %arg1[%c0_117, %c208_118] : memref<8x256xf32, #tpu.memory_space<vmem>>, vector<8x16xf32>
    %c0_119 = arith.constant 0 : index
    %c224_120 = arith.constant 224 : index
    %133 = vector.load %arg1[%c0_119, %c224_120] : memref<8x256xf32, #tpu.memory_space<vmem>>, vector<8x16xf32>
    %134 = arith.mulf %132, %133 : vector<8x16xf32>
    %135 = vector.broadcast %3 : vector<1x16xf32> to vector<8x16xf32>
    %136 = arith.mulf %134, %135 : vector<8x16xf32>
    %c0_121 = arith.constant 0 : index
    %c336 = arith.constant 336 : index
    %137 = vector.load %arg3[%c0_121, %c336] : memref<8x384xf32, #tpu.memory_space<vmem>>, vector<8x16xf32>
    tpu.vector_store %arg3[%c0_121, %c336], %136 {strides = array<i32>} : memref<8x384xf32, #tpu.memory_space<vmem>>, vector<8x16xf32>,
    %c0_122 = arith.constant 0 : index
    %c208_123 = arith.constant 208 : index
    %138 = vector.load %arg1[%c0_122, %c208_123] : memref<8x256xf32, #tpu.memory_space<vmem>>, vector<8x16xf32>
    %c0_124 = arith.constant 0 : index
    %c240_125 = arith.constant 240 : index
    %139 = vector.load %arg1[%c0_124, %c240_125] : memref<8x256xf32, #tpu.memory_space<vmem>>, vector<8x16xf32>
    %140 = arith.mulf %138, %139 : vector<8x16xf32>
    %141 = vector.broadcast %4 : vector<1x16xf32> to vector<8x16xf32>
    %142 = arith.mulf %140, %141 : vector<8x16xf32>
    %c0_126 = arith.constant 0 : index
    %c352 = arith.constant 352 : index
    %143 = vector.load %arg3[%c0_126, %c352] : memref<8x384xf32, #tpu.memory_space<vmem>>, vector<8x16xf32>
    tpu.vector_store %arg3[%c0_126, %c352], %142 {strides = array<i32>} : memref<8x384xf32, #tpu.memory_space<vmem>>, vector<8x16xf32>,
    %c0_127 = arith.constant 0 : index
    %c224_128 = arith.constant 224 : index
    %144 = vector.load %arg1[%c0_127, %c224_128] : memref<8x256xf32, #tpu.memory_space<vmem>>, vector<8x16xf32>
    %c0_129 = arith.constant 0 : index
    %c240_130 = arith.constant 240 : index
    %145 = vector.load %arg1[%c0_129, %c240_130] : memref<8x256xf32, #tpu.memory_space<vmem>>, vector<8x16xf32>
    %146 = arith.mulf %144, %145 : vector<8x16xf32>
    %147 = vector.broadcast %5 : vector<1x16xf32> to vector<8x16xf32>
    %148 = arith.mulf %146, %147 : vector<8x16xf32>
    %c0_131 = arith.constant 0 : index
    %c368 = arith.constant 368 : index
    %149 = vector.load %arg3[%c0_131, %c368] : memref<8x384xf32, #tpu.memory_space<vmem>>, vector<8x16xf32>
    tpu.vector_store %arg3[%c0_131, %c368], %148 {strides = array<i32>} : memref<8x384xf32, #tpu.memory_space<vmem>>, vector<8x16xf32>,
    return
  }
  func.func @transform_0(%arg0: i32) -> (i32, i32) {
    %c0_i32 = arith.constant 0 : i32
    %c0_i32_0 = arith.constant 0 : i32
    return %arg0, %c0_i32 : i32, i32
  }
  func.func @transform_1(%arg0: i32) -> (i32, i32) {
    %c0_i32 = arith.constant 0 : i32
    %c0_i32_0 = arith.constant 0 : i32
    %c0_i32_1 = arith.constant 0 : i32
    return %c0_i32, %c0_i32_0 : i32, i32
  }
  func.func @transform_2(%arg0: i32) -> (i32, i32) {
    %c0_i32 = arith.constant 0 : i32
    %c0_i32_0 = arith.constant 0 : i32
    return %arg0, %c0_i32 : i32, i32
  }
}

</mosaic_0001>

<llo_original>
// kernel: tpu_custom_call.1
$region0: #{tpu_custom_call.1}
  #allocation0 [shape = 'u32[]', space=smem, size = 0x4, offset = 0x4, fixed_abs, tag = 'smem constant byte address 0x4 - core index']
  #allocation1 [shape = 'u32[72,128]{1,0:T(1,128)}', space=vmem, size = 0x9000, scoped, tag = 'internal scratch']
  %s0 = inlined_call_operand.hbm [shape: f32[8,256], index: 0, kind: input, shape index: {}]
  %s1 = inlined_call_operand.hbm [shape: f32[1,96], index: 1, kind: input, shape index: {}]
  %s2 = inlined_call_operand.hbm [shape: f32[8,384], index: 2, kind: output, shape index: {}]
  %s3 = sld [smem:[#allocation0]]
  $region26: #{tpu_custom_call.1} parent=0
    _
  %s5 = ssub.s32 1, %s3
  %s6 = scalar_select 0, %s5, %s3
  $region1: #{tpu_custom_call.1} parent=0
    #allocation2 [shape = 'u8[8192]{0}', space=vmem, size = 0x2000, scoped, tag = 'input window, operand 0, single buffered']
    #allocation3 [shape = 's32[1]{0}', space=sflag, size = 0x4, scoped, tag = 'scoped memory for tpu_custom_call.1']
    #allocation4 [shape = 's32[1]{0}', space=sflag, size = 0x4, scoped, tag = 'scoped memory for tpu_custom_call.1']
    #allocation5 [shape = 'u8[512]{0}', space=vmem, size = 0x400, scoped, tag = 'input window, operand 1, single buffered']
    #allocation6 [shape = 's32[1]{0}', space=sflag, size = 0x4, scoped, tag = 'scoped memory for tpu_custom_call.1']
    #allocation7 [shape = 'u8[12288]{0}', space=vmem, size = 0x3000, scoped, tag = 'output window, operand 0, single buffered']
    %7 = vsyncpa [#allocation3], 0
    %8 = vsyncpa [#allocation6], 0
    %9 = vsyncpa [#allocation4], 0
    // Predicated region
    $region2: #{tpu_custom_call.1} parent=1 // pred_check
      _
    $region3: #{tpu_custom_call.1} parent=1 // pred_check_branch
      %11 = sbr.rel (0) target = $region5
    $region4: #{tpu_custom_call.1} parent=1 // pred_region
      %13 = vsyncadd [#allocation3], 0
      %s15 = sshll.u32 %s0, 4
      %s16 = int_to_ptr.hbm [resolvable:$true] %s15
      %s17 = sshll.u32 [#allocation2], 4
      %s18 = int_to_ptr.vmem [resolvable:$true] %s17
      %20 = dma.hbm_to_vmem [thread:$0]  %s16, 256, %s18, [#allocation3]
    $region5: #{tpu_custom_call.1} parent=1 // pred_fallthru
      _
    // Predicated region
    $region6: #{tpu_custom_call.1} parent=1 // pred_check
      _
    $region7: #{tpu_custom_call.1} parent=1 // pred_check_branch
      %22 = sbr.rel (0) target = $region9
    $region8: #{tpu_custom_call.1} parent=1 // pred_region
      %24 = vsyncadd [#allocation6], 0
      %s26 = sshll.u32 %s1, 4
      %s27 = int_to_ptr.hbm [resolvable:$true] %s26
      %s28 = sshll.u32 [#allocation5], 4
      %s29 = int_to_ptr.vmem [resolvable:$true] %s28
      %31 = dma.hbm_to_vmem [thread:$0]  %s27, 16, %s29, [#allocation6]
    $region9: #{tpu_custom_call.1} parent=1 // pred_fallthru
      _
    // Predicated region
    $region10: #{tpu_custom_call.1} parent=1 // pred_check
      _
    $region11: #{tpu_custom_call.1} parent=1 // pred_check_branch
      %33 = sbr.rel (0) target = $region13
    $region12: #{tpu_custom_call.1} parent=1 // pred_region
      %35 = dma.done [#allocation3], 256
    $region13: #{tpu_custom_call.1} parent=1 // pred_fallthru
      _
    // Predicated region
    $region14: #{tpu_custom_call.1} parent=1 // pred_check
      _
    $region15: #{tpu_custom_call.1} parent=1 // pred_check_branch
      %37 = sbr.rel (0) target = $region17
    $region16: #{tpu_custom_call.1} parent=1 // pred_region
      %39 = dma.done [#allocation6], 16
    $region17: #{tpu_custom_call.1} parent=1 // pred_fallthru
      _
    %v40 = vld [vmem:[#allocation5] sm:$0x1]
    %v41 = vld [vmem:[#allocation2] sm:$0xff]
    %43 = vrot.lane.b32.xlu0 %v41, 112
    %v44 = vpop.permute.xlu0 %43
    %v46 = vmul.f32 %v41, %v44
    %v48 = vperm.slane %v40, 0
    %v50 = vmul.f32 %v46, %v48
    %vm51 = vcmask 130048
    %52 = vst.msk [vmem:[#allocation7] sm:$0xff] %vm51, %v50
    %v53 = vld [vmem:[#allocation2] sm:$0xff]
    %55 = vrot.lane.b32.xlu0 %v53, 96
    %v56 = vpop.permute.xlu0 %55
    %v58 = vmul.f32 %v53, %v56
    %59 = vrot.lane.b32.xlu0 %v48, 112
    %v60 = vpop.permute.xlu0 %59
    %v62 = vmul.f32 %v58, %v60
    %64 = vrot.lane.b32.xlu0 %v62, 16
    %v65 = vpop.permute.xlu0 %64
    %vm67 = vcmask 261248
    %68 = vst.msk [vmem:[#allocation7] sm:$0xff] %vm67, %v65
    %v69 = vld [vmem:[#allocation2] sm:$0xff]
    %71 = vrot.lane.b32.xlu0 %v69, 80
    %v72 = vpop.permute.xlu0 %71
    %v74 = vmul.f32 %v69, %v72
    %75 = vrot.lane.b32.xlu0 %v48, 96
    %v76 = vpop.permute.xlu0 %75
    %v78 = vmul.f32 %v74, %v76
    %80 = vrot.lane.b32.xlu0 %v78, 32
    %v81 = vpop.permute.xlu0 %80
    %vm83 = vcmask 392448
    %84 = vst.msk [vmem:[#allocation7] sm:$0xff] %vm83, %v81
    %v85 = vld [vmem:[#allocation2] sm:$0xff]
    %87 = vrot.lane.b32.xlu0 %v85, 112
    %v88 = vpop.permute.xlu0 %87
    %v90 = vmul.f32 %v85, %v88
    %v91 = vmul.f32 %v90, %v76
    %93 = vrot.lane.b32.xlu0 %v91, 32
    %v94 = vpop.permute.xlu0 %93
    %vm96 = vcmask 523648
    %97 = vst.msk [vmem:[#allocation7] sm:$0xff] %vm96, %v94
    %v98 = vld [vmem:[#allocation2] sm:$0xff]
    %100 = vrot.lane.b32.xlu0 %v98, 96
    %v101 = vpop.permute.xlu0 %100
    %v103 = vmul.f32 %v98, %v101
    %104 = vrot.lane.b32.xlu0 %v48, 80
    %v105 = vpop.permute.xlu0 %104
    %v107 = vmul.f32 %v103, %v105
    %109 = vrot.lane.b32.xlu0 %v107, 48
    %v110 = vpop.permute.xlu0 %109
    %vm112 = vcmask 654848
    %113 = vst.msk [vmem:[#allocation7] sm:$0xff] %vm112, %v110
    %v114 = vld [vmem:[#allocation2] sm:$0xff]
    %116 = vrot.lane.b32.xlu0 %v114, 112
    %v117 = vpop.permute.xlu0 %116
    %v119 = vmul.f32 %v114, %v117
    %v120 = vmul.f32 %v119, %v105
    %122 = vrot.lane.b32.xlu0 %v120, 48
    %v123 = vpop.permute.xlu0 %122
    %vm125 = vcmask 786048
    %126 = vst.msk [vmem:[#allocation7] sm:$0xff] %vm125, %v123
    %v127 = vld [vmem:[#allocation2] sm:$0xff]
    %129 = vrot.lane.b32.xlu0 %v127, 112
    %v130 = vpop.permute.xlu0 %129
    %v132 = vmul.f32 %v127, %v130
    %133 = vrot.lane.b32.xlu0 %v48, 64
    %v134 = vpop.permute.xlu0 %133
    %v136 = vmul.f32 %v132, %v134
    %138 = vrot.lane.b32.xlu0 %v136, 32
    %v139 = vpop.permute.xlu0 %138
    %vm141 = vcmask 917248
    %142 = vst.msk [vmem:[#allocation7] sm:$0xff] %vm141, %v139
    %v143 = vld [vmem:[#allocation2] sm:$0xff]
    %145 = vrot.lane.b32.xlu0 %v143, 96
    %v146 = vpop.permute.xlu0 %145
    %v148 = vmul.f32 %v143, %v146
    %149 = vrot.lane.b32.xlu0 %v48, 48
    %v150 = vpop.permute.xlu0 %149
    %v152 = vmul.f32 %v148, %v150
    %154 = vrot.lane.b32.xlu0 %v152, 48
    %v155 = vpop.permute.xlu0 %154
    %vm157 = vcmask 1048448
    %158 = vst.msk [vmem:[#allocation7] sm:$0xff] %vm157, %v155
    %v159 = vld [vmem:[#allocation2] sm:$0xff]
    %161 = vrot.lane.b32.xlu0 %v159, 80
    %v162 = vpop.permute.xlu0 %161
    %v164 = vmul.f32 %v159, %v162
    %165 = vrot.lane.b32.xlu0 %v48, 32
    %v166 = vpop.permute.xlu0 %165
    %v168 = vmul.f32 %v164, %v166
    %170 = vrot.lane.b32.xlu0 %v168, 64
    %v171 = vpop.permute.xlu0 %170
    %173 = vst.msk [vmem:[#allocation7 + $0x8] sm:$0xff] %vm51, %v171
    %v174 = vld [vmem:[#allocation2] sm:$0xff]
    %176 = vrot.lane.b32.xlu0 %v174, 112
    %v177 = vpop.permute.xlu0 %176
    %v179 = vmul.f32 %v174, %v177
    %v180 = vmul.f32 %v179, %v166
    %182 = vrot.lane.b32.xlu0 %v180, 64
    %v183 = vpop.permute.xlu0 %182
    %185 = vst.msk [vmem:[#allocation7 + $0x8] sm:$0xff] %vm67, %v183
    %v186 = vld [vmem:[#allocation2] sm:$0xff]
    %188 = vrot.lane.b32.xlu0 %v186, 96
    %v189 = vpop.permute.xlu0 %188
    %v191 = vmul.f32 %v186, %v189
    %192 = vrot.lane.b32.xlu0 %v48, 16
    %v193 = vpop.permute.xlu0 %192
    %v195 = vmul.f32 %v191, %v193
    %197 = vrot.lane.b32.xlu0 %v195, 80
    %v198 = vpop.permute.xlu0 %197
    %200 = vst.msk [vmem:[#allocation7 + $0x8] sm:$0xff] %vm83, %v198
    %v201 = vld [vmem:[#allocation2] sm:$0xff]
    %203 = vrot.lane.b32.xlu0 %v201, 112
    %v204 = vpop.permute.xlu0 %203
    %v206 = vmul.f32 %v201, %v204
    %v207 = vmul.f32 %v206, %v193
    %209 = vrot.lane.b32.xlu0 %v207, 80
    %v210 = vpop.permute.xlu0 %209
    %212 = vst.msk [vmem:[#allocation7 + $0x8] sm:$0xff] %vm96, %v210
    %v213 = vld [vmem:[#allocation2 + $0x8] sm:$0xff]
    %215 = vrot.lane.b32.xlu0 %v213, 112
    %v216 = vpop.permute.xlu0 %215
    %v218 = vmul.f32 %v213, %v216
    %v219 = vmul.f32 %v218, %v48
    %221 = vrot.lane.b32.xlu0 %v219, 64
    %v222 = vpop.permute.xlu0 %221
    %224 = vst.msk [vmem:[#allocation7 + $0x8] sm:$0xff] %vm112, %v222
    %v225 = vld [vmem:[#allocation2 + $0x8] sm:$0xff]
    %227 = vrot.lane.b32.xlu0 %v225, 96
    %v228 = vpop.permute.xlu0 %227
    %v230 = vmul.f32 %v225, %v228
    %v231 = vmul.f32 %v230, %v60
    %233 = vrot.lane.b32.xlu0 %v231, 80
    %v234 = vpop.permute.xlu0 %233
    %236 = vst.msk [vmem:[#allocation7 + $0x8] sm:$0xff] %vm125, %v234
    %v237 = vld [vmem:[#allocation2 + $0x8] sm:$0xff]
    %239 = vrot.lane.b32.xlu0 %v237, 80
    %v240 = vpop.permute.xlu0 %239
    %v242 = vmul.f32 %v237, %v240
    %v243 = vmul.f32 %v242, %v76
    %245 = vrot.lane.b32.xlu0 %v243, 96
    %v246 = vpop.permute.xlu0 %245
    %248 = vst.msk [vmem:[#allocation7 + $0x8] sm:$0xff] %vm141, %v246
    %v249 = vld [vmem:[#allocation2 + $0x8] sm:$0xff]
    %251 = vrot.lane.b32.xlu0 %v249, 112
    %v252 = vpop.permute.xlu0 %251
    %v254 = vmul.f32 %v249, %v252
    %v255 = vmul.f32 %v254, %v76
    %257 = vrot.lane.b32.xlu0 %v255, 96
    %v258 = vpop.permute.xlu0 %257
    %260 = vst.msk [vmem:[#allocation7 + $0x8] sm:$0xff] %vm157, %v258
    %v261 = vld [vmem:[#allocation2 + $0x8] sm:$0xff]
    %263 = vrot.lane.b32.xlu0 %v261, 96
    %v264 = vpop.permute.xlu0 %263
    %v266 = vmul.f32 %v261, %v264
    %v267 = vmul.f32 %v266, %v105
    %269 = vrot.lane.b32.xlu0 %v267, 112
    %v270 = vpop.permute.xlu0 %269
    %272 = vst.msk [vmem:[#allocation7 + $0x10] sm:$0xff] %vm51, %v270
    %v273 = vld [vmem:[#allocation2 + $0x8] sm:$0xff]
    %275 = vrot.lane.b32.xlu0 %v273, 112
    %v276 = vpop.permute.xlu0 %275
    %v278 = vmul.f32 %v273, %v276
    %v279 = vmul.f32 %v278, %v105
    %281 = vrot.lane.b32.xlu0 %v279, 112
    %v282 = vpop.permute.xlu0 %281
    %284 = vst.msk [vmem:[#allocation7 + $0x10] sm:$0xff] %vm67, %v282
    %v285 = vld [vmem:[#allocation2 + $0x8] sm:$0xff]
    %287 = vrot.lane.b32.xlu0 %v285, 112
    %v288 = vpop.permute.xlu0 %287
    %v290 = vmul.f32 %v285, %v288
    %v291 = vmul.f32 %v290, %v134
    %293 = vrot.lane.b32.xlu0 %v291, 96
    %v294 = vpop.permute.xlu0 %293
    %296 = vst.msk [vmem:[#allocation7 + $0x10] sm:$0xff] %vm83, %v294
    %v297 = vld [vmem:[#allocation2 + $0x8] sm:$0xff]
    %299 = vrot.lane.b32.xlu0 %v297, 96
    %v300 = vpop.permute.xlu0 %299
    %v302 = vmul.f32 %v297, %v300
    %v303 = vmul.f32 %v302, %v150
    %305 = vrot.lane.b32.xlu0 %v303, 112
    %v306 = vpop.permute.xlu0 %305
    %308 = vst.msk [vmem:[#allocation7 + $0x10] sm:$0xff] %vm96, %v306
    %v309 = vld [vmem:[#allocation2 + $0x8] sm:$0xff]
    %311 = vrot.lane.b32.xlu0 %v309, 80
    %v312 = vpop.permute.xlu0 %311
    %v314 = vmul.f32 %v309, %v312
    %v315 = vmul.f32 %v314, %v166
    %316 = vst.msk [vmem:[#allocation7 + $0x10] sm:$0xff] %vm112, %v315
    %v317 = vld [vmem:[#allocation2 + $0x8] sm:$0xff]
    %319 = vrot.lane.b32.xlu0 %v317, 112
    %v320 = vpop.permute.xlu0 %319
    %v322 = vmul.f32 %v317, %v320
    %v323 = vmul.f32 %v322, %v166
    %324 = vst.msk [vmem:[#allocation7 + $0x10] sm:$0xff] %vm125, %v323
    %v325 = vld [vmem:[#allocation2 + $0x8] sm:$0xff]
    %327 = vrot.lane.b32.xlu0 %v325, 96
    %v328 = vpop.permute.xlu0 %327
    %v330 = vmul.f32 %v325, %v328
    %v331 = vmul.f32 %v330, %v193
    %333 = vrot.lane.b32.xlu0 %v331, 16
    %v334 = vpop.permute.xlu0 %333
    %336 = vst.msk [vmem:[#allocation7 + $0x10] sm:$0xff] %vm141, %v334
    %v337 = vld [vmem:[#allocation2 + $0x8] sm:$0xff]
    %339 = vrot.lane.b32.xlu0 %v337, 112
    %v340 = vpop.permute.xlu0 %339
    %v342 = vmul.f32 %v337, %v340
    %v343 = vmul.f32 %v342, %v193
    %345 = vrot.lane.b32.xlu0 %v343, 16
    %v346 = vpop.permute.xlu0 %345
    %348 = vst.msk [vmem:[#allocation7 + $0x10] sm:$0xff] %vm157, %v346
    // Predicated region
    $region18: #{tpu_custom_call.1} parent=1 // pred_check
      _
    $region19: #{tpu_custom_call.1} parent=1 // pred_check_branch
      %350 = sbr.rel (0) target = $region21
    $region20: #{tpu_custom_call.1} parent=1 // pred_region
      %352 = vsyncadd [#allocation4], 0
      %s354 = sshll.u32 [#allocation7], 4
      %s355 = int_to_ptr.vmem [resolvable:$true] %s354
      %s356 = sshll.u32 %s2, 4
      %s357 = int_to_ptr.hbm [resolvable:$true] %s356
      %359 = dma.vmem_to_hbm [thread:$0]  %s355, 384, %s357, [#allocation4]
    $region21: #{tpu_custom_call.1} parent=1 // pred_fallthru
      _
    // Predicated region
    $region22: #{tpu_custom_call.1} parent=1 // pred_check
      _
    $region23: #{tpu_custom_call.1} parent=1 // pred_check_branch
      %361 = sbr.rel (0) target = $region25
    $region24: #{tpu_custom_call.1} parent=1 // pred_region
      %363 = dma.done [#allocation4], 384
    $region25: #{tpu_custom_call.1} parent=1 // pred_fallthru
      _
    %364 = vsyncpa [#allocation3], 1
    %365 = vsyncpa [#allocation6], 1
    %366 = vsyncpa [#allocation4], 1

</llo_original>
